<compile_context>
chip_gen: v6e
topology: v6e:2x2x1
jax: 0.10.0
libtpu: 0.0.40
codegen_flags: <defaults>
</compile_context>

<pallas_src>
import numpy as np
import jax
import jax.numpy as jnp
from jax.experimental import pallas as pl
from jax.experimental.pallas import tpu as pltpu  # noqa: F401  (TPU backend)

# ----------------------------- configuration (module-consistent, small) -----
SENT_DIM  = 48            # sent_dim (divisible by nhead)
NHEAD     = 6             # nhead
DH        = SENT_DIM // NHEAD
EDGE_DIM  = 32            # edge_dim
NUM_CLASS = 7             # num_class
NUM_LAYER = 2             # num_layer
ENC_DIM   = 64            # stand-in token embedding width for the utterance encoder
SEQ_LEN   = 12            # tokens per utterance

NEG = -1e30               # masking constant (finite; no -inf -> no NaN paths)


def _round_up(n, m):
    return ((n + m - 1) // m) * m


def _full_spec(shape):
    """Whole-array VMEM block (grid has a single step)."""
    nd = len(shape)
    return pl.BlockSpec(shape, lambda i, _nd=nd: (0,) * _nd)


# ----------------------------- Pallas kernels -------------------------------
def _encoder_kernel(tok_ref, mask_ref, w_ref, o_ref):
    # Stand-in UtteranceEncoder (encoder_mode='maxpooling'): per-token projection to
    # sent_dim, then masked max-pool over tokens.
    # TODO(synk): the pretrained roberta-large backbone has no clean Pallas
    #             equivalent; only the projection + maxpooling head is reproduced.
    l = tok_ref.shape[0]
    w = w_ref[...]                                   # [ENC, S] bf16
    msk = mask_ref[...]                              # [N, L]  f32

    def proj(i):                                     # static SEQ_LEN unroll, no reshape
        return jnp.dot(tok_ref[i].astype(jnp.bfloat16), w,
                       preferred_element_type=jnp.float32)       # [N, S] f32

    pooled = jnp.where(msk[:, 0:1] > 0.0, proj(0), NEG)
    for i in range(1, l):
        pooled = jnp.maximum(pooled, jnp.where(msk[:, i:i + 1] > 0.0, proj(i), NEG))

    any_valid = jnp.max(msk, axis=1, keepdims=True) > 0.0
    o_ref[...] = jnp.where(any_valid, pooled, 0.0)   # fully-masked rows -> 0 (fix)


def _layer_kernel(x_ref, ea_ref, src_ref, dst_ref,
                  wq_ref, wk_ref, wv_ref, wr_ref, we_ref, wb_ref, y_ref):
    # Fully fused PyG-style TransformerConv(edge_dim, beta=True, root_weight=True,
    # bias=False): projections -> edge mapping -> gather -> masked dense per-head
    # attention (== segment softmax over incoming edges) -> aggregate -> beta gate.
    n, s = x_ref.shape
    e = ea_ref.shape[0]

    x = x_ref[...].astype(jnp.bfloat16)                          # [N, S]
    q = jnp.dot(x, wq_ref[...], preferred_element_type=jnp.float32)
    k = jnp.dot(x, wk_ref[...], preferred_element_type=jnp.float32)
    v = jnp.dot(x, wv_ref[...], preferred_element_type=jnp.float32)
    r = jnp.dot(x, wr_ref[...], preferred_element_type=jnp.float32)

    # one-hot source gather matrix [E, N]: row e selects node src[e] (MXU gather)
    node_iota = jax.lax.broadcasted_iota(jnp.int32, (e, n), 1)
    oh_src = jnp.where(src_ref[...] == node_iota, 1.0, 0.0).astype(jnp.bfloat16)
    k_src = jnp.dot(oh_src, k.astype(jnp.bfloat16), preferred_element_type=jnp.float32)
    v_src = jnp.dot(oh_src, v.astype(jnp.bfloat16), preferred_element_type=jnp.float32)

    # edge_mapping=True: e = edge_attr @ We ; k' = k[src]+e ; v' = v[src]+e
    e_proj = jnp.dot(ea_ref[...].astype(jnp.bfloat16), we_ref[...],
                     preferred_element_type=jnp.float32)         # [E, S]
    k_prime = (k_src + e_proj).astype(jnp.bfloat16)
    v_prime = v_src + e_proj                                     # f32

    # dense destination adjacency [N, E]: adj[n, e] = (dst[e] == n)
    dst_iota = jax.lax.broadcasted_iota(jnp.int32, (n, e), 0)
    adj = dst_ref[...] == dst_iota
    adj_f = jnp.where(adj, 1.0, 0.0)

    lane = jax.lax.broadcasted_iota(jnp.int32, (1, s), 1)
    scale = 1.0 / float(np.sqrt(DH))

    out = jnp.zeros((n, s), jnp.float32)
    for h in range(NHEAD):                                       # static unroll (H=6)
        hm = (lane // DH) == h                                   # head-h lane mask
        q_h = jnp.where(hm, q, 0.0).astype(jnp.bfloat16)         # zero non-head lanes
        # att[n, e] = (q_h[n] . k'[e]) / sqrt(DH)   (only head-h lanes contribute)
        att = jax.lax.dot_general(q_h, k_prime, (((1,), (1,)), ((), ())),
                                  preferred_element_type=jnp.float32) * scale  # [N,E]
        att = jnp.where(adj, att, NEG)
        m = jnp.max(att, axis=-1, keepdims=True)                 # per-destination max
        ex = jnp.exp(att - m) * adj_f                            # masked exp
        denom = jnp.sum(ex, axis=-1, keepdims=True)
        alpha = ex / (denom + 1e-16)                             # segment softmax
        v_h = jnp.where(hm, v_prime, 0.0).astype(jnp.bfloat16)
        out = out + jnp.dot(alpha.astype(jnp.bfloat16), v_h,
                            preferred_element_type=jnp.float32)  # fills head-h lanes

    # beta-gated residual combine: beta = sigmoid([out, r, out-r] @ Wbeta)
    wb = wb_ref[...]                                             # [3, S]
    gl = jnp.sum(out * wb[0:1, :] + r * wb[1:2, :] + (out - r) * wb[2:3, :],
                 axis=-1, keepdims=True)
    beta = jax.nn.sigmoid(gl)
    y_ref[...] = beta * r + (1.0 - beta) * out


def _cls_kernel(m_ref, s_ref, w1_ref, w2_ref, b_ref, o_ref):
    # residual_type == 'cat' fused with the classifier:
    #   logits = [mental, sent] @ W_cls + b = mental @ W1 + sent @ W2 + b
    o_ref[...] = (jnp.dot(m_ref[...].astype(jnp.bfloat16), w1_ref[...],
                          preferred_element_type=jnp.float32)
                  + jnp.dot(s_ref[...].astype(jnp.bfloat16), w2_ref[...],
                            preferred_element_type=jnp.float32)
                  + b_ref[...])


# ----------------------------- Pallas wrappers -------------------------------
def encode_utterances(tokens_lne, masks, w_enc):
    l, npad, enc = tokens_lne.shape
    s = w_enc.shape[1]
    return pl.pallas_call(
        _encoder_kernel,
        out_shape=jax.ShapeDtypeStruct((npad, s), jnp.float32),
        grid=(1,),
        in_specs=[_full_spec((l, npad, enc)), _full_spec((npad, l)),
                  _full_spec((enc, s))],
        out_specs=_full_spec((npad, s)),
    )(tokens_lne, masks, w_enc)


def transformer_conv_layer(x, edge_attr, src_col, dst_row, p):
    npad, s = x.shape
    epad, ed = edge_attr.shape
    return pl.pallas_call(
        _layer_kernel,
        out_shape=jax.ShapeDtypeStruct((npad, s), jnp.float32),
        grid=(1,),
        in_specs=[_full_spec((npad, s)), _full_spec((epad, ed)),
                  _full_spec((epad, 1)), _full_spec((1, epad)),
                  _full_spec((s, s)), _full_spec((s, s)), _full_spec((s, s)),
                  _full_spec((s, s)), _full_spec((ed, s)), _full_spec((3, s))],
        out_specs=_full_spec((npad, s)),
    )(x, edge_attr, src_col, dst_row,
      p["wq"], p["wk"], p["wv"], p["wr"], p["we"], p["wbeta3"])


def residual_classifier(mental, sent, w1, w2, b):
    npad, s = mental.shape
    c = w1.shape[1]
    return pl.pallas_call(
        _cls_kernel,
        out_shape=jax.ShapeDtypeStruct((npad, c), jnp.float32),
        grid=(1,),
        in_specs=[_full_spec((npad, s)), _full_spec((npad, s)),
                  _full_spec((s, c)), _full_spec((s, c)), _full_spec((1, c))],
        out_specs=_full_spec((npad, c)),
    )(mental, sent, w1, w2, b)


# ----------------------------- model pieces ---------------------------------
def build_batched_edges(conv_len, edge_indices, edge_attrs, edge_dim):
    """Per-conversation node-offset batching (matches the torch forward), plus
    one-time edge padding to a multiple of 8 (pad dst=-1 => matches no node)."""
    cumbatch = []
    count = 0
    for i, l in enumerate(conv_len):
        num_edge = int(edge_indices[i].shape[1])
        cumbatch += [count] * num_edge
        count += l
    cum = np.asarray(cumbatch, dtype=np.int32)
    edge_index = np.concatenate(edge_indices, axis=1) + np.stack([cum, cum], axis=0)
    edge_attr = np.concatenate(edge_attrs, axis=0).astype(np.float32)

    e = edge_index.shape[1]
    epad = _round_up(max(e, 8), 8)
    src = np.zeros((epad,), np.int32);           src[:e] = edge_index[0]
    dst = np.full((epad,), -1, dtype=np.int32);  dst[:e] = edge_index[1]
    ea = np.zeros((epad, edge_dim), np.float32); ea[:e] = edge_attr
    return (jnp.asarray(src.reshape(epad, 1)),
            jnp.asarray(dst.reshape(1, epad)),
            jnp.asarray(ea))


def forward(params, tokens, masks, conv_len, edge_indices, edge_attrs):
    n = tokens.shape[0]
    npad = _round_up(max(n, 8), 8)
    pad = npad - n
    # pad once at the boundary; padded rows have zero mask -> sent_emb row = 0
    tokens_p = jnp.pad(tokens, ((0, pad), (0, 0), (0, 0))) if pad else tokens
    masks_p = jnp.pad(masks, ((0, pad), (0, 0))) if pad else masks
    tokens_lne = jnp.transpose(tokens_p, (1, 0, 2))          # [L, Npad, ENC]

    # 1) utterance encoder (one pallas_call)
    sent = encode_utterances(tokens_lne, masks_p, params["w_enc"])       # [Npad, S]

    # 2) batch per-conversation graphs (host-side, padded once)
    src_col, dst_row, edge_attr = build_batched_edges(conv_len, edge_indices,
                                                      edge_attrs, EDGE_DIM)

    # 3) TRMCN: stacked graph-transformer-conv layers (one pallas_call per layer)
    # TODO(synk): TRMCN class body not provided (ff_dim FFN / norm / dropout
    #             internals unknown); implemented as stacked TransformerConv layers
    #             with beta gating and root weight.
    x = sent
    for lp in params["layers"]:
        x = transformer_conv_layer(x, edge_attr, src_col, dst_row, lp)

    # 4) residual 'cat' + classifier (one pallas_call), single slice at the end
    logits = residual_classifier(x, sent, params["w_cls1"], params["w_cls2"],
                                 params["b_cls"])
    return logits[:n]


# ----------------------------- parameter init --------------------------------
def _glorot(key, shape, dtype=jnp.float32):
    scale = (2.0 / (shape[0] + shape[-1])) ** 0.5
    return (jax.random.normal(key, shape) * scale).astype(dtype)


def init_params(key):
    keys = jax.random.split(key, 3 + 6 * NUM_LAYER)
    w_cls = _glorot(keys[1], (2 * SENT_DIM, NUM_CLASS))
    params = {
        "w_enc": _glorot(keys[0], (ENC_DIM, SENT_DIM), jnp.bfloat16),
        "w_cls1": w_cls[:SENT_DIM].astype(jnp.bfloat16),
        "w_cls2": w_cls[SENT_DIM:].astype(jnp.bfloat16),
        "b_cls": (jax.random.normal(keys[2], (1, NUM_CLASS)) * 0.01).astype(jnp.float32),
        "layers": [],
    }
    for l in range(NUM_LAYER):
        k = keys[3 + 6 * l: 3 + 6 * (l + 1)]
        wbeta = _glorot(k[5], (3 * SENT_DIM, 1))
        params["layers"].append({
            "wq": _glorot(k[0], (SENT_DIM, SENT_DIM), jnp.bfloat16),
            "wk": _glorot(k[1], (SENT_DIM, SENT_DIM), jnp.bfloat16),
            "wv": _glorot(k[2], (SENT_DIM, SENT_DIM), jnp.bfloat16),
            "we": _glorot(k[3], (EDGE_DIM, SENT_DIM), jnp.bfloat16),
            "wr": _glorot(k[4], (SENT_DIM, SENT_DIM), jnp.bfloat16),
            "wbeta3": wbeta[:, 0].reshape(3, SENT_DIM),   # rows: out, r, out - r
        })
    return params


# ----------------------------- example inputs --------------------------------
def _make_conv_edges(length):
    # temporal window graph (|i-j| <= 1 incl. self loops), PyG [2, E] (src, dst)
    src, dst = [], []
    for i in range(length):
        for j in range(length):
            if abs(i - j) <= 1:
                src.append(j)
                dst.append(i)
    return np.asarray([src, dst], dtype=np.int32)


if __name__ == "__main__":
    root = jax.random.PRNGKey(0)
    k_par, k_tok, k_e0, k_e1 = jax.random.split(root, 4)

    params = init_params(k_par)

    conv_len = [3, 4]                      # 7 utterances -> exercises node-row padding
    n_utt = sum(conv_len)

    tokens = jax.random.normal(k_tok, (n_utt, SEQ_LEN, ENC_DIM), dtype=jnp.float32)
    lens = np.array([SEQ_LEN - (i % 4) for i in range(n_utt)], dtype=np.int32)
    lens[2] = 0                            # one fully-masked utterance (clamp path)
    masks = jnp.asarray((np.arange(SEQ_LEN)[None, :] < lens[:, None]).astype(np.float32))

    edge_indices = [_make_conv_edges(l) for l in conv_len]
    edge_attrs = [
        np.asarray(jax.random.normal(k_e0, (edge_indices[0].shape[1], EDGE_DIM)),
                   dtype=np.float32),
        np.asarray(jax.random.normal(k_e1, (edge_indices[1].shape[1], EDGE_DIM)),
                   dtype=np.float32),
    ]

    logits = forward(params, tokens, masks, conv_len, edge_indices, edge_attrs)
    logits = jax.block_until_ready(logits)
    assert logits.shape == (n_utt, NUM_CLASS)
    assert bool(jnp.all(jnp.isfinite(logits)))
    print("KERNEL_OK")
</pallas_src>

<mosaic_0001>
module attributes {stable_mosaic.version = 11 : i64} {
  func.func @_encoder_kernel(%arg0: i32, %arg1: memref<12x8x64xf32, #tpu.memory_space<vmem>>, %arg2: memref<8x12xf32, #tpu.memory_space<vmem>>, %arg3: memref<64x48xbf16, #tpu.memory_space<vmem>>, %arg4: memref<8x48xf32, #tpu.memory_space<vmem>>) attributes {dimension_semantics = [#tpu.dimension_semantics<arbitrary>], iteration_bounds = array<i64: 1>, scalar_prefetch = 0 : i64, scratch_operands = 0 : i64, tpu.core_type = #tpu.core_type<tc>, window_params = [{pipeline_mode = #tpu.pipeline_mode<synchronous>, transform_indices = @transform_0, window_bounds = array<i64: 12, 8, 64>}, {pipeline_mode = #tpu.pipeline_mode<synchronous>, transform_indices = @transform_1, window_bounds = array<i64: 8, 12>}, {pipeline_mode = #tpu.pipeline_mode<synchronous>, transform_indices = @transform_2, window_bounds = array<i64: 64, 48>}, {pipeline_mode = #tpu.pipeline_mode<synchronous>, transform_indices = @transform_3, window_bounds = array<i64: 8, 48>}]} {
    %c0 = arith.constant 0 : index
    %c0_0 = arith.constant 0 : index
    %0 = vector.load %arg3[%c0, %c0_0] : memref<64x48xbf16, #tpu.memory_space<vmem>>, vector<64x48xbf16>
    %c0_1 = arith.constant 0 : index
    %c0_2 = arith.constant 0 : index
    %1 = vector.load %arg2[%c0_1, %c0_2] : memref<8x12xf32, #tpu.memory_space<vmem>>, vector<8x12xf32>
    %2 = vector.extract_strided_slice %1 {offsets = [0, 0], sizes = [8, 1], strides = [1, 1]} : vector<8x12xf32> to vector<8x1xf32>
    %cst = arith.constant 0.000000e+00 : f32
    %3 = vector.broadcast %cst : f32 to vector<8x1xf32>
    %4 = arith.cmpf ogt, %2, %3 : vector<8x1xf32>
    %c0_3 = arith.constant 0 : index
    %c0_4 = arith.constant 0 : index
    %c0_5 = arith.constant 0 : index
    %5 = vector.load %arg1[%c0_3, %c0_4, %c0_5] : memref<12x8x64xf32, #tpu.memory_space<vmem>>, vector<1x8x64xf32>
    %6 = vector.shape_cast %5 : vector<1x8x64xf32> to vector<8x64xf32>
    %7 = arith.truncf %6 : vector<8x64xf32> to vector<8x64xbf16>
    %cst_6 = arith.constant dense<0.000000e+00> : vector<8x48xf32>
    %8 = tpu.matmul %7, %0, %cst_6 {dimension_numbers = #tpu.dot_dimension_numbers<[1], [0], [0], [1], [0, 0, 1, 1], [], []>} : vector<8x64xbf16>, vector<64x48xbf16>, vector<8x48xf32> -> vector<8x48xf32>
    %cst_7 = arith.constant -1.000000e+30 : f32
    %9 = vector.shape_cast %4 : vector<8x1xi1> to vector<8x1xi1>
    %10 = vector.broadcast %9 : vector<8x1xi1> to vector<8x48xi1>
    %11 = vector.broadcast %cst_7 : f32 to vector<8x48xf32>
    %12 = arith.select %10, %8, %11 : vector<8x48xi1>, vector<8x48xf32>
    %13 = vector.extract_strided_slice %1 {offsets = [0, 1], sizes = [8, 1], strides = [1, 1]} : vector<8x12xf32> to vector<8x1xf32>
    %cst_8 = arith.constant 0.000000e+00 : f32
    %14 = vector.broadcast %cst_8 : f32 to vector<8x1xf32>
    %15 = arith.cmpf ogt, %13, %14 : vector<8x1xf32>
    %c1 = arith.constant 1 : index
    %c0_9 = arith.constant 0 : index
    %c0_10 = arith.constant 0 : index
    %16 = vector.load %arg1[%c1, %c0_9, %c0_10] : memref<12x8x64xf32, #tpu.memory_space<vmem>>, vector<1x8x64xf32>
    %17 = vector.shape_cast %16 : vector<1x8x64xf32> to vector<8x64xf32>
    %18 = arith.truncf %17 : vector<8x64xf32> to vector<8x64xbf16>
    %cst_11 = arith.constant dense<0.000000e+00> : vector<8x48xf32>
    %19 = tpu.matmul %18, %0, %cst_11 {dimension_numbers = #tpu.dot_dimension_numbers<[1], [0], [0], [1], [0, 0, 1, 1], [], []>} : vector<8x64xbf16>, vector<64x48xbf16>, vector<8x48xf32> -> vector<8x48xf32>
    %cst_12 = arith.constant -1.000000e+30 : f32
    %20 = vector.shape_cast %15 : vector<8x1xi1> to vector<8x1xi1>
    %21 = vector.broadcast %20 : vector<8x1xi1> to vector<8x48xi1>
    %22 = vector.broadcast %cst_12 : f32 to vector<8x48xf32>
    %23 = arith.select %21, %19, %22 : vector<8x48xi1>, vector<8x48xf32>
    %24 = arith.maximumf %12, %23 : vector<8x48xf32>
    %25 = vector.extract_strided_slice %1 {offsets = [0, 2], sizes = [8, 1], strides = [1, 1]} : vector<8x12xf32> to vector<8x1xf32>
    %cst_13 = arith.constant 0.000000e+00 : f32
    %26 = vector.broadcast %cst_13 : f32 to vector<8x1xf32>
    %27 = arith.cmpf ogt, %25, %26 : vector<8x1xf32>
    %c2 = arith.constant 2 : index
    %c0_14 = arith.constant 0 : index
    %c0_15 = arith.constant 0 : index
    %28 = vector.load %arg1[%c2, %c0_14, %c0_15] : memref<12x8x64xf32, #tpu.memory_space<vmem>>, vector<1x8x64xf32>
    %29 = vector.shape_cast %28 : vector<1x8x64xf32> to vector<8x64xf32>
    %30 = arith.truncf %29 : vector<8x64xf32> to vector<8x64xbf16>
    %cst_16 = arith.constant dense<0.000000e+00> : vector<8x48xf32>
    %31 = tpu.matmul %30, %0, %cst_16 {dimension_numbers = #tpu.dot_dimension_numbers<[1], [0], [0], [1], [0, 0, 1, 1], [], []>} : vector<8x64xbf16>, vector<64x48xbf16>, vector<8x48xf32> -> vector<8x48xf32>
    %cst_17 = arith.constant -1.000000e+30 : f32
    %32 = vector.shape_cast %27 : vector<8x1xi1> to vector<8x1xi1>
    %33 = vector.broadcast %32 : vector<8x1xi1> to vector<8x48xi1>
    %34 = vector.broadcast %cst_17 : f32 to vector<8x48xf32>
    %35 = arith.select %33, %31, %34 : vector<8x48xi1>, vector<8x48xf32>
    %36 = arith.maximumf %24, %35 : vector<8x48xf32>
    %37 = vector.extract_strided_slice %1 {offsets = [0, 3], sizes = [8, 1], strides = [1, 1]} : vector<8x12xf32> to vector<8x1xf32>
    %cst_18 = arith.constant 0.000000e+00 : f32
    %38 = vector.broadcast %cst_18 : f32 to vector<8x1xf32>
    %39 = arith.cmpf ogt, %37, %38 : vector<8x1xf32>
    %c3 = arith.constant 3 : index
    %c0_19 = arith.constant 0 : index
    %c0_20 = arith.constant 0 : index
    %40 = vector.load %arg1[%c3, %c0_19, %c0_20] : memref<12x8x64xf32, #tpu.memory_space<vmem>>, vector<1x8x64xf32>
    %41 = vector.shape_cast %40 : vector<1x8x64xf32> to vector<8x64xf32>
    %42 = arith.truncf %41 : vector<8x64xf32> to vector<8x64xbf16>
    %cst_21 = arith.constant dense<0.000000e+00> : vector<8x48xf32>
    %43 = tpu.matmul %42, %0, %cst_21 {dimension_numbers = #tpu.dot_dimension_numbers<[1], [0], [0], [1], [0, 0, 1, 1], [], []>} : vector<8x64xbf16>, vector<64x48xbf16>, vector<8x48xf32> -> vector<8x48xf32>
    %cst_22 = arith.constant -1.000000e+30 : f32
    %44 = vector.shape_cast %39 : vector<8x1xi1> to vector<8x1xi1>
    %45 = vector.broadcast %44 : vector<8x1xi1> to vector<8x48xi1>
    %46 = vector.broadcast %cst_22 : f32 to vector<8x48xf32>
    %47 = arith.select %45, %43, %46 : vector<8x48xi1>, vector<8x48xf32>
    %48 = arith.maximumf %36, %47 : vector<8x48xf32>
    %49 = vector.extract_strided_slice %1 {offsets = [0, 4], sizes = [8, 1], strides = [1, 1]} : vector<8x12xf32> to vector<8x1xf32>
    %cst_23 = arith.constant 0.000000e+00 : f32
    %50 = vector.broadcast %cst_23 : f32 to vector<8x1xf32>
    %51 = arith.cmpf ogt, %49, %50 : vector<8x1xf32>
    %c4 = arith.constant 4 : index
    %c0_24 = arith.constant 0 : index
    %c0_25 = arith.constant 0 : index
    %52 = vector.load %arg1[%c4, %c0_24, %c0_25] : memref<12x8x64xf32, #tpu.memory_space<vmem>>, vector<1x8x64xf32>
    %53 = vector.shape_cast %52 : vector<1x8x64xf32> to vector<8x64xf32>
    %54 = arith.truncf %53 : vector<8x64xf32> to vector<8x64xbf16>
    %cst_26 = arith.constant dense<0.000000e+00> : vector<8x48xf32>
    %55 = tpu.matmul %54, %0, %cst_26 {dimension_numbers = #tpu.dot_dimension_numbers<[1], [0], [0], [1], [0, 0, 1, 1], [], []>} : vector<8x64xbf16>, vector<64x48xbf16>, vector<8x48xf32> -> vector<8x48xf32>
    %cst_27 = arith.constant -1.000000e+30 : f32
    %56 = vector.shape_cast %51 : vector<8x1xi1> to vector<8x1xi1>
    %57 = vector.broadcast %56 : vector<8x1xi1> to vector<8x48xi1>
    %58 = vector.broadcast %cst_27 : f32 to vector<8x48xf32>
    %59 = arith.select %57, %55, %58 : vector<8x48xi1>, vector<8x48xf32>
    %60 = arith.maximumf %48, %59 : vector<8x48xf32>
    %61 = vector.extract_strided_slice %1 {offsets = [0, 5], sizes = [8, 1], strides = [1, 1]} : vector<8x12xf32> to vector<8x1xf32>
    %cst_28 = arith.constant 0.000000e+00 : f32
    %62 = vector.broadcast %cst_28 : f32 to vector<8x1xf32>
    %63 = arith.cmpf ogt, %61, %62 : vector<8x1xf32>
    %c5 = arith.constant 5 : index
    %c0_29 = arith.constant 0 : index
    %c0_30 = arith.constant 0 : index
    %64 = vector.load %arg1[%c5, %c0_29, %c0_30] : memref<12x8x64xf32, #tpu.memory_space<vmem>>, vector<1x8x64xf32>
    %65 = vector.shape_cast %64 : vector<1x8x64xf32> to vector<8x64xf32>
    %66 = arith.truncf %65 : vector<8x64xf32> to vector<8x64xbf16>
    %cst_31 = arith.constant dense<0.000000e+00> : vector<8x48xf32>
    %67 = tpu.matmul %66, %0, %cst_31 {dimension_numbers = #tpu.dot_dimension_numbers<[1], [0], [0], [1], [0, 0, 1, 1], [], []>} : vector<8x64xbf16>, vector<64x48xbf16>, vector<8x48xf32> -> vector<8x48xf32>
    %cst_32 = arith.constant -1.000000e+30 : f32
    %68 = vector.shape_cast %63 : vector<8x1xi1> to vector<8x1xi1>
    %69 = vector.broadcast %68 : vector<8x1xi1> to vector<8x48xi1>
    %70 = vector.broadcast %cst_32 : f32 to vector<8x48xf32>
    %71 = arith.select %69, %67, %70 : vector<8x48xi1>, vector<8x48xf32>
    %72 = arith.maximumf %60, %71 : vector<8x48xf32>
    %73 = vector.extract_strided_slice %1 {offsets = [0, 6], sizes = [8, 1], strides = [1, 1]} : vector<8x12xf32> to vector<8x1xf32>
    %cst_33 = arith.constant 0.000000e+00 : f32
    %74 = vector.broadcast %cst_33 : f32 to vector<8x1xf32>
    %75 = arith.cmpf ogt, %73, %74 : vector<8x1xf32>
    %c6 = arith.constant 6 : index
    %c0_34 = arith.constant 0 : index
    %c0_35 = arith.constant 0 : index
    %76 = vector.load %arg1[%c6, %c0_34, %c0_35] : memref<12x8x64xf32, #tpu.memory_space<vmem>>, vector<1x8x64xf32>
    %77 = vector.shape_cast %76 : vector<1x8x64xf32> to vector<8x64xf32>
    %78 = arith.truncf %77 : vector<8x64xf32> to vector<8x64xbf16>
    %cst_36 = arith.constant dense<0.000000e+00> : vector<8x48xf32>
    %79 = tpu.matmul %78, %0, %cst_36 {dimension_numbers = #tpu.dot_dimension_numbers<[1], [0], [0], [1], [0, 0, 1, 1], [], []>} : vector<8x64xbf16>, vector<64x48xbf16>, vector<8x48xf32> -> vector<8x48xf32>
    %cst_37 = arith.constant -1.000000e+30 : f32
    %80 = vector.shape_cast %75 : vector<8x1xi1> to vector<8x1xi1>
    %81 = vector.broadcast %80 : vector<8x1xi1> to vector<8x48xi1>
    %82 = vector.broadcast %cst_37 : f32 to vector<8x48xf32>
    %83 = arith.select %81, %79, %82 : vector<8x48xi1>, vector<8x48xf32>
    %84 = arith.maximumf %72, %83 : vector<8x48xf32>
    %85 = vector.extract_strided_slice %1 {offsets = [0, 7], sizes = [8, 1], strides = [1, 1]} : vector<8x12xf32> to vector<8x1xf32>
    %cst_38 = arith.constant 0.000000e+00 : f32
    %86 = vector.broadcast %cst_38 : f32 to vector<8x1xf32>
    %87 = arith.cmpf ogt, %85, %86 : vector<8x1xf32>
    %c7 = arith.constant 7 : index
    %c0_39 = arith.constant 0 : index
    %c0_40 = arith.constant 0 : index
    %88 = vector.load %arg1[%c7, %c0_39, %c0_40] : memref<12x8x64xf32, #tpu.memory_space<vmem>>, vector<1x8x64xf32>
    %89 = vector.shape_cast %88 : vector<1x8x64xf32> to vector<8x64xf32>
    %90 = arith.truncf %89 : vector<8x64xf32> to vector<8x64xbf16>
    %cst_41 = arith.constant dense<0.000000e+00> : vector<8x48xf32>
    %91 = tpu.matmul %90, %0, %cst_41 {dimension_numbers = #tpu.dot_dimension_numbers<[1], [0], [0], [1], [0, 0, 1, 1], [], []>} : vector<8x64xbf16>, vector<64x48xbf16>, vector<8x48xf32> -> vector<8x48xf32>
    %cst_42 = arith.constant -1.000000e+30 : f32
    %92 = vector.shape_cast %87 : vector<8x1xi1> to vector<8x1xi1>
    %93 = vector.broadcast %92 : vector<8x1xi1> to vector<8x48xi1>
    %94 = vector.broadcast %cst_42 : f32 to vector<8x48xf32>
    %95 = arith.select %93, %91, %94 : vector<8x48xi1>, vector<8x48xf32>
    %96 = arith.maximumf %84, %95 : vector<8x48xf32>
    %97 = vector.extract_strided_slice %1 {offsets = [0, 8], sizes = [8, 1], strides = [1, 1]} : vector<8x12xf32> to vector<8x1xf32>
    %cst_43 = arith.constant 0.000000e+00 : f32
    %98 = vector.broadcast %cst_43 : f32 to vector<8x1xf32>
    %99 = arith.cmpf ogt, %97, %98 : vector<8x1xf32>
    %c8 = arith.constant 8 : index
    %c0_44 = arith.constant 0 : index
    %c0_45 = arith.constant 0 : index
    %100 = vector.load %arg1[%c8, %c0_44, %c0_45] : memref<12x8x64xf32, #tpu.memory_space<vmem>>, vector<1x8x64xf32>
    %101 = vector.shape_cast %100 : vector<1x8x64xf32> to vector<8x64xf32>
    %102 = arith.truncf %101 : vector<8x64xf32> to vector<8x64xbf16>
    %cst_46 = arith.constant dense<0.000000e+00> : vector<8x48xf32>
    %103 = tpu.matmul %102, %0, %cst_46 {dimension_numbers = #tpu.dot_dimension_numbers<[1], [0], [0], [1], [0, 0, 1, 1], [], []>} : vector<8x64xbf16>, vector<64x48xbf16>, vector<8x48xf32> -> vector<8x48xf32>
    %cst_47 = arith.constant -1.000000e+30 : f32
    %104 = vector.shape_cast %99 : vector<8x1xi1> to vector<8x1xi1>
    %105 = vector.broadcast %104 : vector<8x1xi1> to vector<8x48xi1>
    %106 = vector.broadcast %cst_47 : f32 to vector<8x48xf32>
    %107 = arith.select %105, %103, %106 : vector<8x48xi1>, vector<8x48xf32>
    %108 = arith.maximumf %96, %107 : vector<8x48xf32>
    %109 = vector.extract_strided_slice %1 {offsets = [0, 9], sizes = [8, 1], strides = [1, 1]} : vector<8x12xf32> to vector<8x1xf32>
    %cst_48 = arith.constant 0.000000e+00 : f32
    %110 = vector.broadcast %cst_48 : f32 to vector<8x1xf32>
    %111 = arith.cmpf ogt, %109, %110 : vector<8x1xf32>
    %c9 = arith.constant 9 : index
    %c0_49 = arith.constant 0 : index
    %c0_50 = arith.constant 0 : index
    %112 = vector.load %arg1[%c9, %c0_49, %c0_50] : memref<12x8x64xf32, #tpu.memory_space<vmem>>, vector<1x8x64xf32>
    %113 = vector.shape_cast %112 : vector<1x8x64xf32> to vector<8x64xf32>
    %114 = arith.truncf %113 : vector<8x64xf32> to vector<8x64xbf16>
    %cst_51 = arith.constant dense<0.000000e+00> : vector<8x48xf32>
    %115 = tpu.matmul %114, %0, %cst_51 {dimension_numbers = #tpu.dot_dimension_numbers<[1], [0], [0], [1], [0, 0, 1, 1], [], []>} : vector<8x64xbf16>, vector<64x48xbf16>, vector<8x48xf32> -> vector<8x48xf32>
    %cst_52 = arith.constant -1.000000e+30 : f32
    %116 = vector.shape_cast %111 : vector<8x1xi1> to vector<8x1xi1>
    %117 = vector.broadcast %116 : vector<8x1xi1> to vector<8x48xi1>
    %118 = vector.broadcast %cst_52 : f32 to vector<8x48xf32>
    %119 = arith.select %117, %115, %118 : vector<8x48xi1>, vector<8x48xf32>
    %120 = arith.maximumf %108, %119 : vector<8x48xf32>
    %121 = vector.extract_strided_slice %1 {offsets = [0, 10], sizes = [8, 1], strides = [1, 1]} : vector<8x12xf32> to vector<8x1xf32>
    %cst_53 = arith.constant 0.000000e+00 : f32
    %122 = vector.broadcast %cst_53 : f32 to vector<8x1xf32>
    %123 = arith.cmpf ogt, %121, %122 : vector<8x1xf32>
    %c10 = arith.constant 10 : index
    %c0_54 = arith.constant 0 : index
    %c0_55 = arith.constant 0 : index
    %124 = vector.load %arg1[%c10, %c0_54, %c0_55] : memref<12x8x64xf32, #tpu.memory_space<vmem>>, vector<1x8x64xf32>
    %125 = vector.shape_cast %124 : vector<1x8x64xf32> to vector<8x64xf32>
    %126 = arith.truncf %125 : vector<8x64xf32> to vector<8x64xbf16>
    %cst_56 = arith.constant dense<0.000000e+00> : vector<8x48xf32>
    %127 = tpu.matmul %126, %0, %cst_56 {dimension_numbers = #tpu.dot_dimension_numbers<[1], [0], [0], [1], [0, 0, 1, 1], [], []>} : vector<8x64xbf16>, vector<64x48xbf16>, vector<8x48xf32> -> vector<8x48xf32>
    %cst_57 = arith.constant -1.000000e+30 : f32
    %128 = vector.shape_cast %123 : vector<8x1xi1> to vector<8x1xi1>
    %129 = vector.broadcast %128 : vector<8x1xi1> to vector<8x48xi1>
    %130 = vector.broadcast %cst_57 : f32 to vector<8x48xf32>
    %131 = arith.select %129, %127, %130 : vector<8x48xi1>, vector<8x48xf32>
    %132 = arith.maximumf %120, %131 : vector<8x48xf32>
    %133 = vector.extract_strided_slice %1 {offsets = [0, 11], sizes = [8, 1], strides = [1, 1]} : vector<8x12xf32> to vector<8x1xf32>
    %cst_58 = arith.constant 0.000000e+00 : f32
    %134 = vector.broadcast %cst_58 : f32 to vector<8x1xf32>
    %135 = arith.cmpf ogt, %133, %134 : vector<8x1xf32>
    %c11 = arith.constant 11 : index
    %c0_59 = arith.constant 0 : index
    %c0_60 = arith.constant 0 : index
    %136 = vector.load %arg1[%c11, %c0_59, %c0_60] : memref<12x8x64xf32, #tpu.memory_space<vmem>>, vector<1x8x64xf32>
    %137 = vector.shape_cast %136 : vector<1x8x64xf32> to vector<8x64xf32>
    %138 = arith.truncf %137 : vector<8x64xf32> to vector<8x64xbf16>
    %cst_61 = arith.constant dense<0.000000e+00> : vector<8x48xf32>
    %139 = tpu.matmul %138, %0, %cst_61 {dimension_numbers = #tpu.dot_dimension_numbers<[1], [0], [0], [1], [0, 0, 1, 1], [], []>} : vector<8x64xbf16>, vector<64x48xbf16>, vector<8x48xf32> -> vector<8x48xf32>
    %cst_62 = arith.constant -1.000000e+30 : f32
    %140 = vector.shape_cast %135 : vector<8x1xi1> to vector<8x1xi1>
    %141 = vector.broadcast %140 : vector<8x1xi1> to vector<8x48xi1>
    %142 = vector.broadcast %cst_62 : f32 to vector<8x48xf32>
    %143 = arith.select %141, %139, %142 : vector<8x48xi1>, vector<8x48xf32>
    %144 = arith.maximumf %132, %143 : vector<8x48xf32>
    %cst_63 = arith.constant dense<0xFF800000> : vector<8xf32>
    %145 = vector.multi_reduction <maximumf>, %1, %cst_63 [1] : vector<8x12xf32> to vector<8xf32>
    %146 = vector.shape_cast %145 : vector<8xf32> to vector<8x1xf32>
    %cst_64 = arith.constant 0.000000e+00 : f32
    %147 = vector.broadcast %cst_64 : f32 to vector<8x1xf32>
    %148 = arith.cmpf ogt, %146, %147 : vector<8x1xf32>
    %cst_65 = arith.constant 0.000000e+00 : f32
    %149 = vector.shape_cast %148 : vector<8x1xi1> to vector<8x1xi1>
    %150 = vector.broadcast %149 : vector<8x1xi1> to vector<8x48xi1>
    %151 = vector.broadcast %cst_65 : f32 to vector<8x48xf32>
    %152 = arith.select %150, %144, %151 : vector<8x48xi1>, vector<8x48xf32>
    %c0_66 = arith.constant 0 : index
    %c0_67 = arith.constant 0 : index
    %153 = vector.load %arg4[%c0_66, %c0_67] : memref<8x48xf32, #tpu.memory_space<vmem>>, vector<8x48xf32>
    tpu.vector_store %arg4[%c0_66, %c0_67], %152 {strides = array<i32>} : memref<8x48xf32, #tpu.memory_space<vmem>>, vector<8x48xf32>,
    return
  }
  func.func @transform_0(%arg0: i32) -> (i32, i32, i32) {
    %c0_i32 = arith.constant 0 : i32
    %c0_i32_0 = arith.constant 0 : i32
    %c0_i32_1 = arith.constant 0 : i32
    %c0_i32_2 = arith.constant 0 : i32
    return %c0_i32, %c0_i32_0, %c0_i32_1 : i32, i32, i32
  }
  func.func @transform_1(%arg0: i32) -> (i32, i32) {
    %c0_i32 = arith.constant 0 : i32
    %c0_i32_0 = arith.constant 0 : i32
    %c0_i32_1 = arith.constant 0 : i32
    return %c0_i32, %c0_i32_0 : i32, i32
  }
  func.func @transform_2(%arg0: i32) -> (i32, i32) {
    %c0_i32 = arith.constant 0 : i32
    %c0_i32_0 = arith.constant 0 : i32
    %c0_i32_1 = arith.constant 0 : i32
    return %c0_i32, %c0_i32_0 : i32, i32
  }
  func.func @transform_3(%arg0: i32) -> (i32, i32) {
    %c0_i32 = arith.constant 0 : i32
    %c0_i32_0 = arith.constant 0 : i32
    %c0_i32_1 = arith.constant 0 : i32
    return %c0_i32, %c0_i32_0 : i32, i32
  }
}

</mosaic_0001>

<llo_original>
// kernel: tpu_custom_call.1
$region0: #{tpu_custom_call.1}
  #allocation0 [shape = 'u32[]', space=smem, size = 0x4, offset = 0x4, fixed_abs, tag = 'smem constant byte address 0x4 - core index']
  #allocation1 [shape = 'u32[144,128]{1,0:T(1,128)}', space=vmem, size = 0x12000, scoped, tag = 'internal scratch']
  %s0 = inlined_call_operand.hbm [shape: f32[12,8,64], index: 0, kind: input, shape index: {}]
  %s1 = inlined_call_operand.vmem [shape: f32[8,12], index: 1, kind: input, shape index: {}]
  %s2 = inlined_call_operand.vmem [shape: bf16[64,48], index: 2, kind: input, shape index: {}]
  %s3 = inlined_call_operand.hbm [shape: f32[8,48], index: 3, kind: output, shape index: {}]
  %s4 = sld [smem:[#allocation0]]
  $region26: #{tpu_custom_call.1} parent=0
    _
  %s6 = ssub.s32 1, %s4
  %s7 = scalar_select 0, %s6, %s4
  $region1: #{tpu_custom_call.1} parent=0
    #allocation2 [shape = 'u8[49152]{0}', space=vmem, size = 0xc000, scoped, tag = 'input window, operand 0, single buffered']
    #allocation3 [shape = 's32[1]{0}', space=sflag, size = 0x4, scoped, tag = 'scoped memory for tpu_custom_call.1']
    #allocation4 [shape = 's32[1]{0}', space=sflag, size = 0x4, scoped, tag = 'scoped memory for tpu_custom_call.1']
    #allocation5 [shape = 'u8[4096]{0}', space=vmem, size = 0x1000, scoped, tag = 'output window, operand 0, single buffered']
    %8 = vsyncpa [#allocation3], 0
    %9 = vsyncpa [#allocation4], 0
    // Predicated region
    $region2: #{tpu_custom_call.1} parent=1 // pred_check
      _
    $region3: #{tpu_custom_call.1} parent=1 // pred_check_branch
      %11 = sbr.rel (0) target = $region5
    $region4: #{tpu_custom_call.1} parent=1 // pred_region
      %s13 = ssub.s32 1536, 1536
      %14 = vsyncadd [#allocation3], %s13
      %s15 = sshll.u32 [#allocation2], 4
      %s16 = int_to_ptr.vmem [resolvable:$true] %s15
      %21 = dma.hbm_to_vmem [thread:$0]  %s0, 1536, %s16, [#allocation3], 128, 128, 8
    $region5: #{tpu_custom_call.1} parent=1 // pred_fallthru
      _
    // Predicated region
    $region6: #{tpu_custom_call.1} parent=1 // pred_check
      _
    $region7: #{tpu_custom_call.1} parent=1 // pred_check_branch
      %23 = sbr.rel (0) target = $region9
    $region8: #{tpu_custom_call.1} parent=1 // pred_region
      _
    $region9: #{tpu_custom_call.1} parent=1 // pred_fallthru
      _
    // Predicated region
    $region10: #{tpu_custom_call.1} parent=1 // pred_check
      _
    $region11: #{tpu_custom_call.1} parent=1 // pred_check_branch
      %25 = sbr.rel (0) target = $region13
    $region12: #{tpu_custom_call.1} parent=1 // pred_region
      _
    $region13: #{tpu_custom_call.1} parent=1 // pred_fallthru
      _
    // Predicated region
    $region14: #{tpu_custom_call.1} parent=1 // pred_check
      _
    $region15: #{tpu_custom_call.1} parent=1 // pred_check_branch
      %27 = sbr.rel (0) target = $region17
    $region16: #{tpu_custom_call.1} parent=1 // pred_region
      %28 = dma.done [#allocation3], 1536
    $region17: #{tpu_custom_call.1} parent=1 // pred_fallthru
      _
    %v30 = vld [vmem:[%s2] sm:$0xf]
    %v31 = vld [vmem:[%s2 + $0x4] sm:$0xf]
    %v32 = vld [vmem:[%s2 + $0x8] sm:$0xf]
    %v33 = vld [vmem:[%s2 + $0xc] sm:$0xf]
    %v34 = vld [vmem:[%s2 + $0x10] sm:$0xf]
    %v35 = vld [vmem:[%s2 + $0x14] sm:$0xf]
    %v36 = vld [vmem:[%s2 + $0x18] sm:$0xf]
    %v37 = vld [vmem:[%s2 + $0x1c] sm:$0xf]
    %v38 = vld [vmem:[%s1] sm:$0xff]
    %vm39 = vcmp.gt.f32.partialorder %v38, 0.0
    %v40 = vld [vmem:[#allocation2] sm:$0xff]
    %v41 = vpack.c.bf16 %v40, %v40
    %v50 = vunpack.c.l.b16 %v30
    %v51 = vunpack.c.l.b16 %v31
    %v52 = vunpack.c.l.b16 %v32
    %v53 = vunpack.c.l.b16 %v33
    %v54 = vunpack.c.l.b16 %v34
    %v55 = vunpack.c.l.b16 %v35
    %v56 = vunpack.c.l.b16 %v36
    %v57 = vunpack.c.l.b16 %v37
    %v58 = vpack.c.b16 %v51, %v50
    %v59 = vpack.c.b16 %v53, %v52
    %v60 = vpack.c.b16 %v55, %v54
    %v61 = vpack.c.b16 %v57, %v56
    %vm66 = vcmask 523264
    %v68 = vsel %vm66, %v41, 0
    %70 = vmatprep.subr.bf16.mxu0 0
    %71 = vmatpush1.bf16.msra.mxu0 0
    %72 = vmatprep.subr.bf16.mxu0 0
    %73 = vmatpush1.bf16.msra.mxu0 0
    %74 = vmatprep.subr.bf16.mxu0 0
    %75 = vmatpush1.bf16.msra.mxu0 0
    %76 = vmatprep.subr.bf16.mxu0 0
    %77 = vmatpush1.bf16.msra.mxu0 0
    %78 = vmatprep.subr.bf16.mxu0 0
    %79 = vmatpush1.bf16.msra.mxu0 %v61
    %80 = vmatprep.subr.bf16.mxu0 0
    %81 = vmatpush1.bf16.msra.mxu0 %v60
    %82 = vmatprep.subr.bf16.mxu0 0
    %83 = vmatpush1.bf16.msra.mxu0 %v59
    %84 = vmatprep.subr.bf16.mxu0 0
    %85 = vmatpush1.bf16.msra.mxu0 %v58
    %86 = vmatprep.subr.bf16.mxu0 0
    %87 = vmatpush2.bf16.msra.mxu0 0
    %88 = vmatprep.subr.bf16.mxu0 0
    %89 = vmatpush2.bf16.msra.mxu0 0
    %90 = vmatprep.subr.bf16.mxu0 0
    %91 = vmatpush2.bf16.msra.mxu0 0
    %92 = vmatprep.subr.bf16.mxu0 0
    %93 = vmatpush2.bf16.msra.mxu0 0
    %94 = vmatprep.subr.bf16.mxu0 0
    %95 = vmatpush2.bf16.msra.mxu0 0
    %96 = vmatprep.subr.bf16.mxu0 0
    %97 = vmatpush2.bf16.msra.mxu0 0
    %98 = vmatprep.subr.bf16.mxu0 0
    %99 = vmatpush2.bf16.msra.mxu0 0
    %100 = vmatprep.subr.bf16.mxu0 0
    %101 = vmatpush2.bf16.msra.mxu0 0
    %102 = vmatprep.mubr.bf16.mxu0 0
    %103 = vmatmul.mubr.bf16.gmra.mxu0 %v68
    %v104 = vpop.f32.mrf.mxu0
    %v105 = vadd.f32 0.0, %v104
    %v106 = vpop.f32.mrf.mxu0
    %v107 = vpop.f32.mrf.mxu0
    %v108 = vpop.f32.mrf.mxu0
    %109 = vdwg.mxu0
    %v110 = vsel %vm39, 1, 0
    %111 = vset.pattern.permute.xlu0 0
    %112 = vperm.xlu0 %111, %v110
    %v113 = vpop.permute.xlu0 %112
    %vm114 = vcmp.eq.s32.totalorder %v113, 1
    %v115 = vsel %vm114, %v105, -1e+30
    %s116 = scalar_lea.vmem [#allocation2], 8
    %v117 = vld [vmem:[%s116] sm:$0xff]
    %v118 = vpack.c.bf16 %v117, %v117
    %v120 = vsel %vm66, %v118, 0
    %122 = vmatprep.subr.bf16.mxu0 0
    %123 = vmatpush1.bf16.msra.mxu0 0
    %124 = vmatprep.subr.bf16.mxu0 0
    %125 = vmatpush1.bf16.msra.mxu0 0
    %126 = vmatprep.subr.bf16.mxu0 0
    %127 = vmatpush1.bf16.msra.mxu0 0
    %128 = vmatprep.subr.bf16.mxu0 0
    %129 = vmatpush1.bf16.msra.mxu0 0
    %130 = vmatprep.subr.bf16.mxu0 0
    %131 = vmatpush1.bf16.msra.mxu0 %v61
    %132 = vmatprep.subr.bf16.mxu0 0
    %133 = vmatpush1.bf16.msra.mxu0 %v60
    %134 = vmatprep.subr.bf16.mxu0 0
    %135 = vmatpush1.bf16.msra.mxu0 %v59
    %136 = vmatprep.subr.bf16.mxu0 0
    %137 = vmatpush1.bf16.msra.mxu0 %v58
    %138 = vmatprep.subr.bf16.mxu0 0
    %139 = vmatpush2.bf16.msra.mxu0 0
    %140 = vmatprep.subr.bf16.mxu0 0
    %141 = vmatpush2.bf16.msra.mxu0 0
    %142 = vmatprep.subr.bf16.mxu0 0
    %143 = vmatpush2.bf16.msra.mxu0 0
    %144 = vmatprep.subr.bf16.mxu0 0
    %145 = vmatpush2.bf16.msra.mxu0 0
    %146 = vmatprep.subr.bf16.mxu0 0
    %147 = vmatpush2.bf16.msra.mxu0 0
    %148 = vmatprep.subr.bf16.mxu0 0
    %149 = vmatpush2.bf16.msra.mxu0 0
    %150 = vmatprep.subr.bf16.mxu0 0
    %151 = vmatpush2.bf16.msra.mxu0 0
    %152 = vmatprep.subr.bf16.mxu0 0
    %153 = vmatpush2.bf16.msra.mxu0 0
    %154 = vmatprep.mubr.bf16.mxu0 0
    %155 = vmatmul.mubr.bf16.gmra.mxu0 %v120
    %v156 = vpop.f32.mrf.mxu0
    %v157 = vadd.f32 0.0, %v156
    %v158 = vpop.f32.mrf.mxu0
    %v159 = vpop.f32.mrf.mxu0
    %v160 = vpop.f32.mrf.mxu0
    %161 = vdwg.mxu0
    %162 = vset.pattern.permute.xlu0 1
    %163 = vperm.xlu0 %162, %v110
    %v164 = vpop.permute.xlu0 %163
    %vm165 = vcmp.eq.s32.totalorder %v164, 1
    %v166 = vsel %vm165, %v157, -1e+30
    %v167 = vmax.f32 %v115, %v166
    %s168 = scalar_lea.vmem [#allocation2], 16
    %v169 = vld [vmem:[%s168] sm:$0xff]
    %v170 = vpack.c.bf16 %v169, %v169
    %v172 = vsel %vm66, %v170, 0
    %174 = vmatprep.subr.bf16.mxu0 0
    %175 = vmatpush1.bf16.msra.mxu0 0
    %176 = vmatprep.subr.bf16.mxu0 0
    %177 = vmatpush1.bf16.msra.mxu0 0
    %178 = vmatprep.subr.bf16.mxu0 0
    %179 = vmatpush1.bf16.msra.mxu0 0
    %180 = vmatprep.subr.bf16.mxu0 0
    %181 = vmatpush1.bf16.msra.mxu0 0
    %182 = vmatprep.subr.bf16.mxu0 0
    %183 = vmatpush1.bf16.msra.mxu0 %v61
    %184 = vmatprep.subr.bf16.mxu0 0
    %185 = vmatpush1.bf16.msra.mxu0 %v60
    %186 = vmatprep.subr.bf16.mxu0 0
    %187 = vmatpush1.bf16.msra.mxu0 %v59
    %188 = vmatprep.subr.bf16.mxu0 0
    %189 = vmatpush1.bf16.msra.mxu0 %v58
    %190 = vmatprep.subr.bf16.mxu0 0
    %191 = vmatpush2.bf16.msra.mxu0 0
    %192 = vmatprep.subr.bf16.mxu0 0
    %193 = vmatpush2.bf16.msra.mxu0 0
    %194 = vmatprep.subr.bf16.mxu0 0
    %195 = vmatpush2.bf16.msra.mxu0 0
    %196 = vmatprep.subr.bf16.mxu0 0
    %197 = vmatpush2.bf16.msra.mxu0 0
    %198 = vmatprep.subr.bf16.mxu0 0
    %199 = vmatpush2.bf16.msra.mxu0 0
    %200 = vmatprep.subr.bf16.mxu0 0
    %201 = vmatpush2.bf16.msra.mxu0 0
    %202 = vmatprep.subr.bf16.mxu0 0
    %203 = vmatpush2.bf16.msra.mxu0 0
    %204 = vmatprep.subr.bf16.mxu0 0
    %205 = vmatpush2.bf16.msra.mxu0 0
    %206 = vmatprep.mubr.bf16.mxu0 0
    %207 = vmatmul.mubr.bf16.gmra.mxu0 %v172
    %v208 = vpop.f32.mrf.mxu0
    %v209 = vadd.f32 0.0, %v208
    %v210 = vpop.f32.mrf.mxu0
    %v211 = vpop.f32.mrf.mxu0
    %v212 = vpop.f32.mrf.mxu0
    %213 = vdwg.mxu0
    %214 = vset.pattern.permute.xlu0 2
    %215 = vperm.xlu0 %214, %v110
    %v216 = vpop.permute.xlu0 %215
    %vm217 = vcmp.eq.s32.totalorder %v216, 1
    %v218 = vsel %vm217, %v209, -1e+30
    %v219 = vmax.f32 %v167, %v218
    %s220 = scalar_lea.vmem [#allocation2], 24
    %v221 = vld [vmem:[%s220] sm:$0xff]
    %v222 = vpack.c.bf16 %v221, %v221
    %v224 = vsel %vm66, %v222, 0
    %226 = vmatprep.subr.bf16.mxu0 0
    %227 = vmatpush1.bf16.msra.mxu0 0
    %228 = vmatprep.subr.bf16.mxu0 0
    %229 = vmatpush1.bf16.msra.mxu0 0
    %230 = vmatprep.subr.bf16.mxu0 0
    %231 = vmatpush1.bf16.msra.mxu0 0
    %232 = vmatprep.subr.bf16.mxu0 0
    %233 = vmatpush1.bf16.msra.mxu0 0
    %234 = vmatprep.subr.bf16.mxu0 0
    %235 = vmatpush1.bf16.msra.mxu0 %v61
    %236 = vmatprep.subr.bf16.mxu0 0
    %237 = vmatpush1.bf16.msra.mxu0 %v60
    %238 = vmatprep.subr.bf16.mxu0 0
    %239 = vmatpush1.bf16.msra.mxu0 %v59
    %240 = vmatprep.subr.bf16.mxu0 0
    %241 = vmatpush1.bf16.msra.mxu0 %v58
    %242 = vmatprep.subr.bf16.mxu0 0
    %243 = vmatpush2.bf16.msra.mxu0 0
    %244 = vmatprep.subr.bf16.mxu0 0
    %245 = vmatpush2.bf16.msra.mxu0 0
    %246 = vmatprep.subr.bf16.mxu0 0
    %247 = vmatpush2.bf16.msra.mxu0 0
    %248 = vmatprep.subr.bf16.mxu0 0
    %249 = vmatpush2.bf16.msra.mxu0 0
    %250 = vmatprep.subr.bf16.mxu0 0
    %251 = vmatpush2.bf16.msra.mxu0 0
    %252 = vmatprep.subr.bf16.mxu0 0
    %253 = vmatpush2.bf16.msra.mxu0 0
    %254 = vmatprep.subr.bf16.mxu0 0
    %255 = vmatpush2.bf16.msra.mxu0 0
    %256 = vmatprep.subr.bf16.mxu0 0
    %257 = vmatpush2.bf16.msra.mxu0 0
    %258 = vmatprep.mubr.bf16.mxu0 0
    %259 = vmatmul.mubr.bf16.gmra.mxu0 %v224
    %v260 = vpop.f32.mrf.mxu0
    %v261 = vadd.f32 0.0, %v260
    %v262 = vpop.f32.mrf.mxu0
    %v263 = vpop.f32.mrf.mxu0
    %v264 = vpop.f32.mrf.mxu0
    %265 = vdwg.mxu0
    %266 = vset.pattern.permute.xlu0 3
    %267 = vperm.xlu0 %266, %v110
    %v268 = vpop.permute.xlu0 %267
    %vm269 = vcmp.eq.s32.totalorder %v268, 1
    %v270 = vsel %vm269, %v261, -1e+30
    %v271 = vmax.f32 %v219, %v270
    %s272 = scalar_lea.vmem [#allocation2], 32
    %v273 = vld [vmem:[%s272] sm:$0xff]
    %v274 = vpack.c.bf16 %v273, %v273
    %v276 = vsel %vm66, %v274, 0
    %278 = vmatprep.subr.bf16.mxu0 0
    %279 = vmatpush1.bf16.msra.mxu0 0
    %280 = vmatprep.subr.bf16.mxu0 0
    %281 = vmatpush1.bf16.msra.mxu0 0
    %282 = vmatprep.subr.bf16.mxu0 0
    %283 = vmatpush1.bf16.msra.mxu0 0
    %284 = vmatprep.subr.bf16.mxu0 0
    %285 = vmatpush1.bf16.msra.mxu0 0
    %286 = vmatprep.subr.bf16.mxu0 0
    %287 = vmatpush1.bf16.msra.mxu0 %v61
    %288 = vmatprep.subr.bf16.mxu0 0
    %289 = vmatpush1.bf16.msra.mxu0 %v60
    %290 = vmatprep.subr.bf16.mxu0 0
    %291 = vmatpush1.bf16.msra.mxu0 %v59
    %292 = vmatprep.subr.bf16.mxu0 0
    %293 = vmatpush1.bf16.msra.mxu0 %v58
    %294 = vmatprep.subr.bf16.mxu0 0
    %295 = vmatpush2.bf16.msra.mxu0 0
    %296 = vmatprep.subr.bf16.mxu0 0
    %297 = vmatpush2.bf16.msra.mxu0 0
    %298 = vmatprep.subr.bf16.mxu0 0
    %299 = vmatpush2.bf16.msra.mxu0 0
    %300 = vmatprep.subr.bf16.mxu0 0
    %301 = vmatpush2.bf16.msra.mxu0 0
    %302 = vmatprep.subr.bf16.mxu0 0
    %303 = vmatpush2.bf16.msra.mxu0 0
    %304 = vmatprep.subr.bf16.mxu0 0
    %305 = vmatpush2.bf16.msra.mxu0 0
    %306 = vmatprep.subr.bf16.mxu0 0
    %307 = vmatpush2.bf16.msra.mxu0 0
    %308 = vmatprep.subr.bf16.mxu0 0
    %309 = vmatpush2.bf16.msra.mxu0 0
    %310 = vmatprep.mubr.bf16.mxu0 0
    %311 = vmatmul.mubr.bf16.gmra.mxu0 %v276
    %v312 = vpop.f32.mrf.mxu0
    %v313 = vadd.f32 0.0, %v312
    %v314 = vpop.f32.mrf.mxu0
    %v315 = vpop.f32.mrf.mxu0
    %v316 = vpop.f32.mrf.mxu0
    %317 = vdwg.mxu0
    %318 = vset.pattern.permute.xlu0 4
    %319 = vperm.xlu0 %318, %v110
    %v320 = vpop.permute.xlu0 %319
    %vm321 = vcmp.eq.s32.totalorder %v320, 1
    %v322 = vsel %vm321, %v313, -1e+30
    %v323 = vmax.f32 %v271, %v322
    %s324 = scalar_lea.vmem [#allocation2], 40
    %v325 = vld [vmem:[%s324] sm:$0xff]
    %v326 = vpack.c.bf16 %v325, %v325
    %v328 = vsel %vm66, %v326, 0
    %330 = vmatprep.subr.bf16.mxu0 0
    %331 = vmatpush1.bf16.msra.mxu0 0
    %332 = vmatprep.subr.bf16.mxu0 0
    %333 = vmatpush1.bf16.msra.mxu0 0
    %334 = vmatprep.subr.bf16.mxu0 0
    %335 = vmatpush1.bf16.msra.mxu0 0
    %336 = vmatprep.subr.bf16.mxu0 0
    %337 = vmatpush1.bf16.msra.mxu0 0
    %338 = vmatprep.subr.bf16.mxu0 0
    %339 = vmatpush1.bf16.msra.mxu0 %v61
    %340 = vmatprep.subr.bf16.mxu0 0
    %341 = vmatpush1.bf16.msra.mxu0 %v60
    %342 = vmatprep.subr.bf16.mxu0 0
    %343 = vmatpush1.bf16.msra.mxu0 %v59
    %344 = vmatprep.subr.bf16.mxu0 0
    %345 = vmatpush1.bf16.msra.mxu0 %v58
    %346 = vmatprep.subr.bf16.mxu0 0
    %347 = vmatpush2.bf16.msra.mxu0 0
    %348 = vmatprep.subr.bf16.mxu0 0
    %349 = vmatpush2.bf16.msra.mxu0 0
    %350 = vmatprep.subr.bf16.mxu0 0
    %351 = vmatpush2.bf16.msra.mxu0 0
    %352 = vmatprep.subr.bf16.mxu0 0
    %353 = vmatpush2.bf16.msra.mxu0 0
    %354 = vmatprep.subr.bf16.mxu0 0
    %355 = vmatpush2.bf16.msra.mxu0 0
    %356 = vmatprep.subr.bf16.mxu0 0
    %357 = vmatpush2.bf16.msra.mxu0 0
    %358 = vmatprep.subr.bf16.mxu0 0
    %359 = vmatpush2.bf16.msra.mxu0 0
    %360 = vmatprep.subr.bf16.mxu0 0
    %361 = vmatpush2.bf16.msra.mxu0 0
    %362 = vmatprep.mubr.bf16.mxu0 0
    %363 = vmatmul.mubr.bf16.gmra.mxu0 %v328
    %v364 = vpop.f32.mrf.mxu0
    %v365 = vadd.f32 0.0, %v364
    %v366 = vpop.f32.mrf.mxu0
    %v367 = vpop.f32.mrf.mxu0
    %v368 = vpop.f32.mrf.mxu0
    %369 = vdwg.mxu0
    %370 = vset.pattern.permute.xlu0 5
    %371 = vperm.xlu0 %370, %v110
    %v372 = vpop.permute.xlu0 %371
    %vm373 = vcmp.eq.s32.totalorder %v372, 1
    %v374 = vsel %vm373, %v365, -1e+30
    %v375 = vmax.f32 %v323, %v374
    %s376 = scalar_lea.vmem [#allocation2], 48
    %v377 = vld [vmem:[%s376] sm:$0xff]
    %v378 = vpack.c.bf16 %v377, %v377
    %v380 = vsel %vm66, %v378, 0
    %382 = vmatprep.subr.bf16.mxu0 0
    %383 = vmatpush1.bf16.msra.mxu0 0
    %384 = vmatprep.subr.bf16.mxu0 0
    %385 = vmatpush1.bf16.msra.mxu0 0
    %386 = vmatprep.subr.bf16.mxu0 0
    %387 = vmatpush1.bf16.msra.mxu0 0
    %388 = vmatprep.subr.bf16.mxu0 0
    %389 = vmatpush1.bf16.msra.mxu0 0
    %390 = vmatprep.subr.bf16.mxu0 0
    %391 = vmatpush1.bf16.msra.mxu0 %v61
    %392 = vmatprep.subr.bf16.mxu0 0
    %393 = vmatpush1.bf16.msra.mxu0 %v60
    %394 = vmatprep.subr.bf16.mxu0 0
    %395 = vmatpush1.bf16.msra.mxu0 %v59
    %396 = vmatprep.subr.bf16.mxu0 0
    %397 = vmatpush1.bf16.msra.mxu0 %v58
    %398 = vmatprep.subr.bf16.mxu0 0
    %399 = vmatpush2.bf16.msra.mxu0 0
    %400 = vmatprep.subr.bf16.mxu0 0
    %401 = vmatpush2.bf16.msra.mxu0 0
    %402 = vmatprep.subr.bf16.mxu0 0
    %403 = vmatpush2.bf16.msra.mxu0 0
    %404 = vmatprep.subr.bf16.mxu0 0
    %405 = vmatpush2.bf16.msra.mxu0 0
    %406 = vmatprep.subr.bf16.mxu0 0
    %407 = vmatpush2.bf16.msra.mxu0 0
    %408 = vmatprep.subr.bf16.mxu0 0
    %409 = vmatpush2.bf16.msra.mxu0 0
    %410 = vmatprep.subr.bf16.mxu0 0
    %411 = vmatpush2.bf16.msra.mxu0 0
    %412 = vmatprep.subr.bf16.mxu0 0
    %413 = vmatpush2.bf16.msra.mxu0 0
    %414 = vmatprep.mubr.bf16.mxu0 0
    %415 = vmatmul.mubr.bf16.gmra.mxu0 %v380
    %v416 = vpop.f32.mrf.mxu0
    %v417 = vadd.f32 0.0, %v416
    %v418 = vpop.f32.mrf.mxu0
    %v419 = vpop.f32.mrf.mxu0
    %v420 = vpop.f32.mrf.mxu0
    %421 = vdwg.mxu0
    %422 = vset.pattern.permute.xlu0 6
    %423 = vperm.xlu0 %422, %v110
    %v424 = vpop.permute.xlu0 %423
    %vm425 = vcmp.eq.s32.totalorder %v424, 1
    %v426 = vsel %vm425, %v417, -1e+30
    %v427 = vmax.f32 %v375, %v426
    %s428 = scalar_lea.vmem [#allocation2], 56
    %v429 = vld [vmem:[%s428] sm:$0xff]
    %v430 = vpack.c.bf16 %v429, %v429
    %v432 = vsel %vm66, %v430, 0
    %434 = vmatprep.subr.bf16.mxu0 0
    %435 = vmatpush1.bf16.msra.mxu0 0
    %436 = vmatprep.subr.bf16.mxu0 0
    %437 = vmatpush1.bf16.msra.mxu0 0
    %438 = vmatprep.subr.bf16.mxu0 0
    %439 = vmatpush1.bf16.msra.mxu0 0
    %440 = vmatprep.subr.bf16.mxu0 0
    %441 = vmatpush1.bf16.msra.mxu0 0
    %442 = vmatprep.subr.bf16.mxu0 0
    %443 = vmatpush1.bf16.msra.mxu0 %v61
    %444 = vmatprep.subr.bf16.mxu0 0
    %445 = vmatpush1.bf16.msra.mxu0 %v60
    %446 = vmatprep.subr.bf16.mxu0 0
    %447 = vmatpush1.bf16.msra.mxu0 %v59
    %448 = vmatprep.subr.bf16.mxu0 0
    %449 = vmatpush1.bf16.msra.mxu0 %v58
    %450 = vmatprep.subr.bf16.mxu0 0
    %451 = vmatpush2.bf16.msra.mxu0 0
    %452 = vmatprep.subr.bf16.mxu0 0
    %453 = vmatpush2.bf16.msra.mxu0 0
    %454 = vmatprep.subr.bf16.mxu0 0
    %455 = vmatpush2.bf16.msra.mxu0 0
    %456 = vmatprep.subr.bf16.mxu0 0
    %457 = vmatpush2.bf16.msra.mxu0 0
    %458 = vmatprep.subr.bf16.mxu0 0
    %459 = vmatpush2.bf16.msra.mxu0 0
    %460 = vmatprep.subr.bf16.mxu0 0
    %461 = vmatpush2.bf16.msra.mxu0 0
    %462 = vmatprep.subr.bf16.mxu0 0
    %463 = vmatpush2.bf16.msra.mxu0 0
    %464 = vmatprep.subr.bf16.mxu0 0
    %465 = vmatpush2.bf16.msra.mxu0 0
    %466 = vmatprep.mubr.bf16.mxu0 0
    %467 = vmatmul.mubr.bf16.gmra.mxu0 %v432
    %v468 = vpop.f32.mrf.mxu0
    %v469 = vadd.f32 0.0, %v468
    %v470 = vpop.f32.mrf.mxu0
    %v471 = vpop.f32.mrf.mxu0
    %v472 = vpop.f32.mrf.mxu0
    %473 = vdwg.mxu0
    %474 = vset.pattern.permute.xlu0 7
    %475 = vperm.xlu0 %474, %v110
    %v476 = vpop.permute.xlu0 %475
    %vm477 = vcmp.eq.s32.totalorder %v476, 1
    %v478 = vsel %vm477, %v469, -1e+30
    %v479 = vmax.f32 %v427, %v478
    %s480 = scalar_lea.vmem [#allocation2], 64
    %v481 = vld [vmem:[%s480] sm:$0xff]
    %v482 = vpack.c.bf16 %v481, %v481
    %v484 = vsel %vm66, %v482, 0
    %486 = vmatprep.subr.bf16.mxu0 0
    %487 = vmatpush1.bf16.msra.mxu0 0
    %488 = vmatprep.subr.bf16.mxu0 0
    %489 = vmatpush1.bf16.msra.mxu0 0
    %490 = vmatprep.subr.bf16.mxu0 0
    %491 = vmatpush1.bf16.msra.mxu0 0
    %492 = vmatprep.subr.bf16.mxu0 0
    %493 = vmatpush1.bf16.msra.mxu0 0
    %494 = vmatprep.subr.bf16.mxu0 0
    %495 = vmatpush1.bf16.msra.mxu0 %v61
    %496 = vmatprep.subr.bf16.mxu0 0
    %497 = vmatpush1.bf16.msra.mxu0 %v60
    %498 = vmatprep.subr.bf16.mxu0 0
    %499 = vmatpush1.bf16.msra.mxu0 %v59
    %500 = vmatprep.subr.bf16.mxu0 0
    %501 = vmatpush1.bf16.msra.mxu0 %v58
    %502 = vmatprep.subr.bf16.mxu0 0
    %503 = vmatpush2.bf16.msra.mxu0 0
    %504 = vmatprep.subr.bf16.mxu0 0
    %505 = vmatpush2.bf16.msra.mxu0 0
    %506 = vmatprep.subr.bf16.mxu0 0
    %507 = vmatpush2.bf16.msra.mxu0 0
    %508 = vmatprep.subr.bf16.mxu0 0
    %509 = vmatpush2.bf16.msra.mxu0 0
    %510 = vmatprep.subr.bf16.mxu0 0
    %511 = vmatpush2.bf16.msra.mxu0 0
    %512 = vmatprep.subr.bf16.mxu0 0
    %513 = vmatpush2.bf16.msra.mxu0 0
    %514 = vmatprep.subr.bf16.mxu0 0
    %515 = vmatpush2.bf16.msra.mxu0 0
    %516 = vmatprep.subr.bf16.mxu0 0
    %517 = vmatpush2.bf16.msra.mxu0 0
    %518 = vmatprep.mubr.bf16.mxu0 0
    %519 = vmatmul.mubr.bf16.gmra.mxu0 %v484
    %v520 = vpop.f32.mrf.mxu0
    %v521 = vadd.f32 0.0, %v520
    %v522 = vpop.f32.mrf.mxu0
    %v523 = vpop.f32.mrf.mxu0
    %v524 = vpop.f32.mrf.mxu0
    %525 = vdwg.mxu0
    %526 = vset.pattern.permute.xlu0 8
    %527 = vperm.xlu0 %526, %v110
    %v528 = vpop.permute.xlu0 %527
    %vm529 = vcmp.eq.s32.totalorder %v528, 1
    %v530 = vsel %vm529, %v521, -1e+30
    %v531 = vmax.f32 %v479, %v530
    %s532 = scalar_lea.vmem [#allocation2], 72
    %v533 = vld [vmem:[%s532] sm:$0xff]
    %v534 = vpack.c.bf16 %v533, %v533
    %v536 = vsel %vm66, %v534, 0
    %538 = vmatprep.subr.bf16.mxu0 0
    %539 = vmatpush1.bf16.msra.mxu0 0
    %540 = vmatprep.subr.bf16.mxu0 0
    %541 = vmatpush1.bf16.msra.mxu0 0
    %542 = vmatprep.subr.bf16.mxu0 0
    %543 = vmatpush1.bf16.msra.mxu0 0
    %544 = vmatprep.subr.bf16.mxu0 0
    %545 = vmatpush1.bf16.msra.mxu0 0
    %546 = vmatprep.subr.bf16.mxu0 0
    %547 = vmatpush1.bf16.msra.mxu0 %v61
    %548 = vmatprep.subr.bf16.mxu0 0
    %549 = vmatpush1.bf16.msra.mxu0 %v60
    %550 = vmatprep.subr.bf16.mxu0 0
    %551 = vmatpush1.bf16.msra.mxu0 %v59
    %552 = vmatprep.subr.bf16.mxu0 0
    %553 = vmatpush1.bf16.msra.mxu0 %v58
    %554 = vmatprep.subr.bf16.mxu0 0
    %555 = vmatpush2.bf16.msra.mxu0 0
    %556 = vmatprep.subr.bf16.mxu0 0
    %557 = vmatpush2.bf16.msra.mxu0 0
    %558 = vmatprep.subr.bf16.mxu0 0
    %559 = vmatpush2.bf16.msra.mxu0 0
    %560 = vmatprep.subr.bf16.mxu0 0
    %561 = vmatpush2.bf16.msra.mxu0 0
    %562 = vmatprep.subr.bf16.mxu0 0
    %563 = vmatpush2.bf16.msra.mxu0 0
    %564 = vmatprep.subr.bf16.mxu0 0
    %565 = vmatpush2.bf16.msra.mxu0 0
    %566 = vmatprep.subr.bf16.mxu0 0
    %567 = vmatpush2.bf16.msra.mxu0 0
    %568 = vmatprep.subr.bf16.mxu0 0
    %569 = vmatpush2.bf16.msra.mxu0 0
    %570 = vmatprep.mubr.bf16.mxu0 0
    %571 = vmatmul.mubr.bf16.gmra.mxu0 %v536
    %v572 = vpop.f32.mrf.mxu0
    %v573 = vadd.f32 0.0, %v572
    %v574 = vpop.f32.mrf.mxu0
    %v575 = vpop.f32.mrf.mxu0
    %v576 = vpop.f32.mrf.mxu0
    %577 = vdwg.mxu0
    %578 = vset.pattern.permute.xlu0 9
    %579 = vperm.xlu0 %578, %v110
    %v580 = vpop.permute.xlu0 %579
    %vm581 = vcmp.eq.s32.totalorder %v580, 1
    %v582 = vsel %vm581, %v573, -1e+30
    %v583 = vmax.f32 %v531, %v582
    %s584 = scalar_lea.vmem [#allocation2], 80
    %v585 = vld [vmem:[%s584] sm:$0xff]
    %v586 = vpack.c.bf16 %v585, %v585
    %v588 = vsel %vm66, %v586, 0
    %590 = vmatprep.subr.bf16.mxu0 0
    %591 = vmatpush1.bf16.msra.mxu0 0
    %592 = vmatprep.subr.bf16.mxu0 0
    %593 = vmatpush1.bf16.msra.mxu0 0
    %594 = vmatprep.subr.bf16.mxu0 0
    %595 = vmatpush1.bf16.msra.mxu0 0
    %596 = vmatprep.subr.bf16.mxu0 0
    %597 = vmatpush1.bf16.msra.mxu0 0
    %598 = vmatprep.subr.bf16.mxu0 0
    %599 = vmatpush1.bf16.msra.mxu0 %v61
    %600 = vmatprep.subr.bf16.mxu0 0
    %601 = vmatpush1.bf16.msra.mxu0 %v60
    %602 = vmatprep.subr.bf16.mxu0 0
    %603 = vmatpush1.bf16.msra.mxu0 %v59
    %604 = vmatprep.subr.bf16.mxu0 0
    %605 = vmatpush1.bf16.msra.mxu0 %v58
    %606 = vmatprep.subr.bf16.mxu0 0
    %607 = vmatpush2.bf16.msra.mxu0 0
    %608 = vmatprep.subr.bf16.mxu0 0
    %609 = vmatpush2.bf16.msra.mxu0 0
    %610 = vmatprep.subr.bf16.mxu0 0
    %611 = vmatpush2.bf16.msra.mxu0 0
    %612 = vmatprep.subr.bf16.mxu0 0
    %613 = vmatpush2.bf16.msra.mxu0 0
    %614 = vmatprep.subr.bf16.mxu0 0
    %615 = vmatpush2.bf16.msra.mxu0 0
    %616 = vmatprep.subr.bf16.mxu0 0
    %617 = vmatpush2.bf16.msra.mxu0 0
    %618 = vmatprep.subr.bf16.mxu0 0
    %619 = vmatpush2.bf16.msra.mxu0 0
    %620 = vmatprep.subr.bf16.mxu0 0
    %621 = vmatpush2.bf16.msra.mxu0 0
    %622 = vmatprep.mubr.bf16.mxu0 0
    %623 = vmatmul.mubr.bf16.gmra.mxu0 %v588
    %v624 = vpop.f32.mrf.mxu0
    %v625 = vadd.f32 0.0, %v624
    %v626 = vpop.f32.mrf.mxu0
    %v627 = vpop.f32.mrf.mxu0
    %v628 = vpop.f32.mrf.mxu0
    %629 = vdwg.mxu0
    %630 = vset.pattern.permute.xlu0 10
    %631 = vperm.xlu0 %630, %v110
    %v632 = vpop.permute.xlu0 %631
    %vm633 = vcmp.eq.s32.totalorder %v632, 1
    %v634 = vsel %vm633, %v625, -1e+30
    %v635 = vmax.f32 %v583, %v634
    %s636 = scalar_lea.vmem [#allocation2], 88
    %v637 = vld [vmem:[%s636] sm:$0xff]
    %v638 = vpack.c.bf16 %v637, %v637
    %v640 = vsel %vm66, %v638, 0
    %642 = vmatprep.subr.bf16.mxu0 0
    %643 = vmatpush1.bf16.msra.mxu0 0
    %644 = vmatprep.subr.bf16.mxu0 0
    %645 = vmatpush1.bf16.msra.mxu0 0
    %646 = vmatprep.subr.bf16.mxu0 0
    %647 = vmatpush1.bf16.msra.mxu0 0
    %648 = vmatprep.subr.bf16.mxu0 0
    %649 = vmatpush1.bf16.msra.mxu0 0
    %650 = vmatprep.subr.bf16.mxu0 0
    %651 = vmatpush1.bf16.msra.mxu0 %v61
    %652 = vmatprep.subr.bf16.mxu0 0
    %653 = vmatpush1.bf16.msra.mxu0 %v60
    %654 = vmatprep.subr.bf16.mxu0 0
    %655 = vmatpush1.bf16.msra.mxu0 %v59
    %656 = vmatprep.subr.bf16.mxu0 0
    %657 = vmatpush1.bf16.msra.mxu0 %v58
    %658 = vmatprep.subr.bf16.mxu0 0
    %659 = vmatpush2.bf16.msra.mxu0 0
    %660 = vmatprep.subr.bf16.mxu0 0
    %661 = vmatpush2.bf16.msra.mxu0 0
    %662 = vmatprep.subr.bf16.mxu0 0
    %663 = vmatpush2.bf16.msra.mxu0 0
    %664 = vmatprep.subr.bf16.mxu0 0
    %665 = vmatpush2.bf16.msra.mxu0 0
    %666 = vmatprep.subr.bf16.mxu0 0
    %667 = vmatpush2.bf16.msra.mxu0 0
    %668 = vmatprep.subr.bf16.mxu0 0
    %669 = vmatpush2.bf16.msra.mxu0 0
    %670 = vmatprep.subr.bf16.mxu0 0
    %671 = vmatpush2.bf16.msra.mxu0 0
    %672 = vmatprep.subr.bf16.mxu0 0
    %673 = vmatpush2.bf16.msra.mxu0 0
    %674 = vmatprep.mubr.bf16.mxu0 0
    %675 = vmatmul.mubr.bf16.gmra.mxu0 %v640
    %v676 = vpop.f32.mrf.mxu0
    %v677 = vadd.f32 0.0, %v676
    %v678 = vpop.f32.mrf.mxu0
    %v679 = vpop.f32.mrf.mxu0
    %v680 = vpop.f32.mrf.mxu0
    %681 = vdwg.mxu0
    %682 = vset.pattern.permute.xlu0 11
    %683 = vperm.xlu0 %682, %v110
    %v684 = vpop.permute.xlu0 %683
    %vm685 = vcmp.eq.s32.totalorder %v684, 1
    %v686 = vsel %vm685, %v677, -1e+30
    %v687 = vmax.f32 %v635, %v686
    %vm688 = vcmask 97280
    %v689 = vsel %vm688, %v38, -inf
    %690 = vmax.xlane.f32.xlu0 %v689
    %v691 = vpop.xlane.xlu0 %690
    %vm692 = vcmp.gt.f32.partialorder %v691, 0.0
    %v693 = vsel %vm692, 1, 0
    %vm694 = vcmp.eq.s32.totalorder %v693, 1
    %v695 = vsel %vm694, %v687, 0.0
    %vm696 = vcmask 392192
    %697 = vst.msk [vmem:[#allocation5] sm:$0xff] %vm696, %v695
    // Predicated region
    $region18: #{tpu_custom_call.1} parent=1 // pred_check
      _
    $region19: #{tpu_custom_call.1} parent=1 // pred_check_branch
      %699 = sbr.rel (0) target = $region21
    $region20: #{tpu_custom_call.1} parent=1 // pred_region
      %s701 = ssub.s32 128, 128
      %702 = vsyncadd [#allocation4], %s701
      %s704 = sshll.u32 [#allocation5], 4
      %s705 = int_to_ptr.vmem [resolvable:$true] %s704
      %707 = dma.vmem_to_hbm [thread:$0]  %s705, 128, %s3, [#allocation4]
    $region21: #{tpu_custom_call.1} parent=1 // pred_fallthru
      _
    // Predicated region
    $region22: #{tpu_custom_call.1} parent=1 // pred_check
      _
    $region23: #{tpu_custom_call.1} parent=1 // pred_check_branch
      %709 = sbr.rel (0) target = $region25
    $region24: #{tpu_custom_call.1} parent=1 // pred_region
      %710 = dma.done [#allocation4], 128
    $region25: #{tpu_custom_call.1} parent=1 // pred_fallthru
      _
    %711 = vsyncpa [#allocation3], 1
    %712 = vsyncpa [#allocation4], 1

</llo_original>
